<compile_context>
chip_gen: v6e
topology: v6e:2x2x1
jax: 0.10.0
libtpu: 0.0.40
codegen_flags: <defaults>
</compile_context>

<pallas_src>
import jax
import jax.numpy as jnp
from jax.experimental import pallas as pl
from jax.experimental.pallas import tpu as pltpu

EPS = 1e-6


def _sublayer_kernel(x_ref, y_ref, gamma_ref, beta_ref, o_ref):
    # Residual add (dropout == identity in eval mode).
    # TODO(synk): training-mode dropout (pltpu.prng_*) not implemented; eval path only.
    z = x_ref[...].astype(jnp.float32) + y_ref[...].astype(jnp.float32)

    h = z.shape[-1]
    # Single-pass statistics: one read of z feeds both row sums.
    s1 = jnp.sum(z, axis=-1, keepdims=True)
    s2 = jnp.sum(z * z, axis=-1, keepdims=True)
    mean = s1 * jnp.float32(1.0 / h)
    # Unbiased variance (Bessel, ddof=1) to match torch.Tensor.std; clamp at 0
    # to guard against f32 cancellation (E[z^2] - E[z]^2 can go slightly
    # negative when |mean| >> std).
    var = jnp.maximum(s2 - s1 * mean, jnp.float32(0.0)) * jnp.float32(1.0 / (h - 1))
    std = jnp.sqrt(var)
    # Per-row reciprocal (block_rows values) on the EUP path instead of a
    # block_rows x H divide. Matches the f32 reference to within 1 ulp.
    inv = pl.reciprocal(std + jnp.float32(EPS), approx=False)

    gamma = gamma_ref[...].astype(jnp.float32)  # (1, H), broadcasts over rows
    beta = beta_ref[...].astype(jnp.float32)
    # Fused output pass: (z - mean) * inv * gamma + beta in one sweep.
    o_ref[...] = ((z - mean) * (inv * gamma) + beta).astype(o_ref.dtype)


def _vmem_capacity_bytes():
    """Per-core VMEM capacity; conservative fallback if the query fails."""
    try:
        info = pltpu.get_tpu_info()
        cap = getattr(info, "vmem_capacity_bytes", None)
        if cap:
            return int(cap)
    except Exception:
        pass
    return 64 * 1024 * 1024  # v7x per-TC worst case


def _pick_block_rows(rows, H, itemsize, vmem_cap):
    """Row tile: >= ~8 MiB of HBM traffic per grid step, under the VMEM budget."""
    # Generation-aware live-buffer budget (v7x: 64 MiB/TC; v5e/v6e: 128 MiB).
    if vmem_cap <= 64 * 1024 * 1024:
        budget = 16 * 1024 * 1024
    else:
        budget = 32 * 1024 * 1024
    # Per-row VMEM cost: 3 tiled arrays x 2 pipeline buffers at the I/O dtype,
    # plus ~4 f32-wide in-kernel intermediates (z, z*z temp, f32 out, slack).
    vmem_bytes_per_row = H * (3 * 2 * itemsize + 4 * 4)
    rows_vmem = max(8, budget // vmem_bytes_per_row)
    # Traffic floor: each step should move >= ~8 MiB of HBM traffic
    # (x read + y read + out write) to amortize ~0.35 us/step overhead.
    hbm_bytes_per_row = 3 * H * itemsize
    rows_traffic = max(8, (8 * 1024 * 1024 + hbm_bytes_per_row - 1) // hbm_bytes_per_row)
    br = min(rows_vmem, rows_traffic)
    br = max(8, (br // 8) * 8)               # (8, 128) tiling rule on the sublane axis
    # Never larger than the (rounded-up-to-8) row count.
    br = min(br, max(8, ((rows + 7) // 8) * 8))
    return int(br)


def sublayer_connection(x, sublayer_out, a_2, b_2, *, block_rows=None):
    """x, sublayer_out: (B, S, H); a_2, b_2: (H,). Returns (B, S, H)."""
    B, S, H = x.shape
    rows = B * S
    x2 = x.reshape(rows, H)
    y2 = sublayer_out.reshape(rows, H)
    gamma = a_2.reshape(1, H)
    beta = b_2.reshape(1, H)

    itemsize = jnp.dtype(x.dtype).itemsize
    vmem_cap = _vmem_capacity_bytes()
    if block_rows is None:
        block_rows = _pick_block_rows(rows, H, itemsize, vmem_cap)
    else:
        block_rows = min(int(block_rows), max(8, ((rows + 7) // 8) * 8))
        block_rows = max(8, (block_rows // 8) * 8)

    # No input padding / output slicing: Pallas masks the partial trailing block.
    grid = (pl.cdiv(rows, block_rows),)

    vmem_limit = 40 * 1024 * 1024 if vmem_cap <= 64 * 1024 * 1024 else 64 * 1024 * 1024

    out = pl.pallas_call(
        _sublayer_kernel,
        out_shape=jax.ShapeDtypeStruct((rows, H), x.dtype),
        grid_spec=pltpu.PrefetchScalarGridSpec(
            num_scalar_prefetch=0,
            grid=grid,
            in_specs=[
                pl.BlockSpec((block_rows, H), lambda i: (i, 0)),
                pl.BlockSpec((block_rows, H), lambda i: (i, 0)),
                pl.BlockSpec((1, H), lambda i: (0, 0)),
                pl.BlockSpec((1, H), lambda i: (0, 0)),
            ],
            out_specs=pl.BlockSpec((block_rows, H), lambda i: (i, 0)),
        ),
        compiler_params=pltpu.CompilerParams(
            dimension_semantics=("parallel",),   # shard rows across v7x's 2 TCs
            vmem_limit_bytes=vmem_limit,
        ),
    )(x2, y2, gamma, beta)

    return out.reshape(B, S, H)


def _reference(x, sublayer_out, a_2, b_2):
    z = x + sublayer_out
    mean = jnp.mean(z, axis=-1, keepdims=True)
    d = z - mean
    var = jnp.sum(d * d, axis=-1, keepdims=True) / (z.shape[-1] - 1)
    std = jnp.sqrt(var)
    return a_2 * d / (std + EPS) + b_2


if __name__ == "__main__":
    key = jax.random.PRNGKey(0)

    # Main check: batch=2, seq=8, hidden(size)=32.
    B, S, H = 2, 8, 32
    kx, ky = jax.random.split(key)
    x = jax.random.normal(kx, (B, S, H), dtype=jnp.float32)
    sub = jax.random.normal(ky, (B, S, H), dtype=jnp.float32)
    a_2 = jnp.ones((H,), dtype=jnp.float32)   # LayerNorm.__init__ defaults
    b_2 = jnp.zeros((H,), dtype=jnp.float32)

    out = jax.block_until_ready(sublayer_connection(x, sub, a_2, b_2))
    ref = _reference(x, sub, a_2, b_2)
    assert jnp.allclose(out, ref, atol=1e-5, rtol=1e-5), "mismatch vs reference"

    # Tail-handling check: rows (B*S = 15) not a multiple of the row tile
    # exercises the masked partial trailing block (no padding / slicing done).
    B2, S2 = 3, 5
    kx2, ky2 = jax.random.split(ky)
    x2 = jax.random.normal(kx2, (B2, S2, H), dtype=jnp.float32)
    sub2 = jax.random.normal(ky2, (B2, S2, H), dtype=jnp.float32)
    out2 = jax.block_until_ready(sublayer_connection(x2, sub2, a_2, b_2))
    ref2 = _reference(x2, sub2, a_2, b_2)
    assert jnp.allclose(out2, ref2, atol=1e-5, rtol=1e-5), "mismatch vs reference (tail)"

    print("KERNEL_OK")
</pallas_src>

<mosaic_0001>
module attributes {stable_mosaic.version = 11 : i64} {
  func.func @_sublayer_kernel(%arg0: i32, %arg1: memref<16x32xf32, #tpu.memory_space<vmem>>, %arg2: memref<16x32xf32, #tpu.memory_space<vmem>>, %arg3: memref<1x32xf32, #tpu.memory_space<vmem>>, %arg4: memref<1x32xf32, #tpu.memory_space<vmem>>, %arg5: memref<16x32xf32, #tpu.memory_space<vmem>>) attributes {dimension_semantics = [#tpu.dimension_semantics<parallel>], iteration_bounds = array<i64: 1>, scalar_prefetch = 0 : i64, scratch_operands = 0 : i64, tpu.core_type = #tpu.core_type<tc>, window_params = [{transform_indices = @transform_0, window_bounds = array<i64: 16, 32>}, {transform_indices = @transform_1, window_bounds = array<i64: 16, 32>}, {pipeline_mode = #tpu.pipeline_mode<synchronous>, transform_indices = @transform_2, window_bounds = array<i64: 1, 32>}, {pipeline_mode = #tpu.pipeline_mode<synchronous>, transform_indices = @transform_3, window_bounds = array<i64: 1, 32>}, {transform_indices = @transform_4, window_bounds = array<i64: 16, 32>}]} {
    %c0 = arith.constant 0 : index
    %c0_0 = arith.constant 0 : index
    %0 = vector.load %arg1[%c0, %c0_0] : memref<16x32xf32, #tpu.memory_space<vmem>>, vector<16x32xf32>
    %c0_1 = arith.constant 0 : index
    %c0_2 = arith.constant 0 : index
    %1 = vector.load %arg2[%c0_1, %c0_2] : memref<16x32xf32, #tpu.memory_space<vmem>>, vector<16x32xf32>
    %2 = arith.addf %0, %1 : vector<16x32xf32>
    %cst = arith.constant dense<0.000000e+00> : vector<16xf32>
    %3 = vector.multi_reduction <add>, %2, %cst [1] : vector<16x32xf32> to vector<16xf32>
    %4 = vector.shape_cast %3 : vector<16xf32> to vector<16x1xf32>
    %5 = arith.mulf %2, %2 : vector<16x32xf32>
    %cst_3 = arith.constant dense<0.000000e+00> : vector<16xf32>
    %6 = vector.multi_reduction <add>, %5, %cst_3 [1] : vector<16x32xf32> to vector<16xf32>
    %7 = vector.shape_cast %6 : vector<16xf32> to vector<16x1xf32>
    %cst_4 = arith.constant 3.125000e-02 : f32
    %8 = vector.broadcast %cst_4 : f32 to vector<16x1xf32>
    %9 = arith.mulf %4, %8 : vector<16x1xf32>
    %10 = arith.mulf %4, %9 : vector<16x1xf32>
    %11 = arith.subf %7, %10 : vector<16x1xf32>
    %cst_5 = arith.constant 0.000000e+00 : f32
    %12 = vector.broadcast %cst_5 : f32 to vector<16x1xf32>
    %13 = arith.maximumf %11, %12 : vector<16x1xf32>
    %cst_6 = arith.constant 0.0322580636 : f32
    %14 = vector.broadcast %cst_6 : f32 to vector<16x1xf32>
    %15 = arith.mulf %13, %14 : vector<16x1xf32>
    %16 = math.sqrt %15 : vector<16x1xf32>
    %cst_7 = arith.constant 9.99999997E-7 : f32
    %17 = vector.broadcast %cst_7 : f32 to vector<16x1xf32>
    %18 = arith.addf %16, %17 : vector<16x1xf32>
    %19 = tpu.reciprocal %18 : vector<16x1xf32> -> vector<16x1xf32>
    %c0_8 = arith.constant 0 : index
    %c0_9 = arith.constant 0 : index
    %20 = vector.load %arg3[%c0_8, %c0_9] : memref<1x32xf32, #tpu.memory_space<vmem>>, vector<1x32xf32>
    %c0_10 = arith.constant 0 : index
    %c0_11 = arith.constant 0 : index
    %21 = vector.load %arg4[%c0_10, %c0_11] : memref<1x32xf32, #tpu.memory_space<vmem>>, vector<1x32xf32>
    %22 = vector.broadcast %9 : vector<16x1xf32> to vector<16x32xf32>
    %23 = arith.subf %2, %22 : vector<16x32xf32>
    %24 = vector.broadcast %19 : vector<16x1xf32> to vector<16x32xf32>
    %25 = vector.broadcast %20 : vector<1x32xf32> to vector<16x32xf32>
    %26 = arith.mulf %24, %25 : vector<16x32xf32>
    %27 = arith.mulf %23, %26 : vector<16x32xf32>
    %28 = vector.broadcast %21 : vector<1x32xf32> to vector<16x32xf32>
    %29 = arith.addf %27, %28 : vector<16x32xf32>
    %c0_12 = arith.constant 0 : index
    %c0_13 = arith.constant 0 : index
    %30 = vector.load %arg5[%c0_12, %c0_13] : memref<16x32xf32, #tpu.memory_space<vmem>>, vector<16x32xf32>
    tpu.vector_store %arg5[%c0_12, %c0_13], %29 {strides = array<i32>} : memref<16x32xf32, #tpu.memory_space<vmem>>, vector<16x32xf32>,
    return
  }
  func.func @transform_0(%arg0: i32) -> (i32, i32) {
    %c0_i32 = arith.constant 0 : i32
    %c0_i32_0 = arith.constant 0 : i32
    return %arg0, %c0_i32 : i32, i32
  }
  func.func @transform_1(%arg0: i32) -> (i32, i32) {
    %c0_i32 = arith.constant 0 : i32
    %c0_i32_0 = arith.constant 0 : i32
    return %arg0, %c0_i32 : i32, i32
  }
  func.func @transform_2(%arg0: i32) -> (i32, i32) {
    %c0_i32 = arith.constant 0 : i32
    %c0_i32_0 = arith.constant 0 : i32
    %c0_i32_1 = arith.constant 0 : i32
    return %c0_i32, %c0_i32_0 : i32, i32
  }
  func.func @transform_3(%arg0: i32) -> (i32, i32) {
    %c0_i32 = arith.constant 0 : i32
    %c0_i32_0 = arith.constant 0 : i32
    %c0_i32_1 = arith.constant 0 : i32
    return %c0_i32, %c0_i32_0 : i32, i32
  }
  func.func @transform_4(%arg0: i32) -> (i32, i32) {
    %c0_i32 = arith.constant 0 : i32
    %c0_i32_0 = arith.constant 0 : i32
    return %arg0, %c0_i32 : i32, i32
  }
}

</mosaic_0001>

<llo_original>
// kernel: tpu_custom_call.1
$region0: #{tpu_custom_call.1}
  #allocation0 [shape = 'u32[]', space=smem, size = 0x4, offset = 0x4, fixed_abs, tag = 'smem constant byte address 0x4 - core index']
  #allocation1 [shape = 'u32[144,128]{1,0:T(1,128)}', space=vmem, size = 0x12000, scoped, tag = 'internal scratch']
  %s0 = inlined_call_operand.hbm [shape: f32[16,32], index: 0, kind: input, shape index: {}]
  %s1 = inlined_call_operand.hbm [shape: f32[16,32], index: 1, kind: input, shape index: {}]
  %s2 = inlined_call_operand.vmem [shape: f32[1,32], index: 2, kind: input, shape index: {}]
  %s3 = inlined_call_operand.vmem [shape: f32[1,32], index: 3, kind: input, shape index: {}]
  %s4 = inlined_call_operand.hbm [shape: f32[16,32], index: 4, kind: output, shape index: {}]
  %s5 = sld [smem:[#allocation0]]
  $region34: #{tpu_custom_call.1} parent=0
    _
  %s7 = ssub.s32 1, %s5
  %s8 = scalar_select 0, %s7, %s5
  $region1: #{tpu_custom_call.1} parent=0
    #allocation2 [shape = 'u8[8192]{0}', space=vmem, size = 0x2000, scoped, tag = 'input window, operand 0, single buffered']
    #allocation3 [shape = 's32[1]{0}', space=sflag, size = 0x4, scoped, tag = 'scoped memory for tpu_custom_call.1']
    #allocation4 [shape = 's32[1]{0}', space=sflag, size = 0x4, scoped, tag = 'scoped memory for tpu_custom_call.1']
    #allocation5 [shape = 'u8[8192]{0}', space=vmem, size = 0x2000, scoped, tag = 'input window, operand 1, single buffered']
    #allocation6 [shape = 's32[1]{0}', space=sflag, size = 0x4, scoped, tag = 'scoped memory for tpu_custom_call.1']
    #allocation7 [shape = 'u8[8192]{0}', space=vmem, size = 0x2000, scoped, tag = 'output window, operand 0, single buffered']
    %9 = vsyncpa [#allocation3], 0
    %10 = vsyncpa [#allocation6], 0
    %11 = vsyncpa [#allocation4], 0
    // Predicated region
    $region2: #{tpu_custom_call.1} parent=1 // pred_check
      _
    $region3: #{tpu_custom_call.1} parent=1 // pred_check_branch
      %13 = sbr.rel (0) target = $region5
    $region4: #{tpu_custom_call.1} parent=1 // pred_region
      %s15 = ssub.s32 256, 256
      %16 = vsyncadd [#allocation3], %s15
      %s17 = sshll.u32 [#allocation2], 4
      %s18 = int_to_ptr.vmem [resolvable:$true] %s17
      %23 = dma.hbm_to_vmem [thread:$0]  %s0, 256, %s18, [#allocation3], 128, 128, 8
    $region5: #{tpu_custom_call.1} parent=1 // pred_fallthru
      _
    // Predicated region
    $region6: #{tpu_custom_call.1} parent=1 // pred_check
      _
    $region7: #{tpu_custom_call.1} parent=1 // pred_check_branch
      %25 = sbr.rel (0) target = $region9
    $region8: #{tpu_custom_call.1} parent=1 // pred_region
      %s27 = ssub.s32 256, 256
      %28 = vsyncadd [#allocation6], %s27
      %s29 = sshll.u32 [#allocation5], 4
      %s30 = int_to_ptr.vmem [resolvable:$true] %s29
      %35 = dma.hbm_to_vmem [thread:$0]  %s1, 256, %s30, [#allocation6], 128, 128, 8
    $region9: #{tpu_custom_call.1} parent=1 // pred_fallthru
      _
    // Predicated region
    $region10: #{tpu_custom_call.1} parent=1 // pred_check
      _
    $region11: #{tpu_custom_call.1} parent=1 // pred_check_branch
      %37 = sbr.rel (0) target = $region13
    $region12: #{tpu_custom_call.1} parent=1 // pred_region
      _
    $region13: #{tpu_custom_call.1} parent=1 // pred_fallthru
      _
    // Predicated region
    $region14: #{tpu_custom_call.1} parent=1 // pred_check
      _
    $region15: #{tpu_custom_call.1} parent=1 // pred_check_branch
      %39 = sbr.rel (0) target = $region17
    $region16: #{tpu_custom_call.1} parent=1 // pred_region
      _
    $region17: #{tpu_custom_call.1} parent=1 // pred_fallthru
      _
    // Predicated region
    $region18: #{tpu_custom_call.1} parent=1 // pred_check
      _
    $region19: #{tpu_custom_call.1} parent=1 // pred_check_branch
      %41 = sbr.rel (0) target = $region21
    $region20: #{tpu_custom_call.1} parent=1 // pred_region
      %42 = dma.done [#allocation3], 256
    $region21: #{tpu_custom_call.1} parent=1 // pred_fallthru
      _
    // Predicated region
    $region22: #{tpu_custom_call.1} parent=1 // pred_check
      _
    $region23: #{tpu_custom_call.1} parent=1 // pred_check_branch
      %44 = sbr.rel (0) target = $region25
    $region24: #{tpu_custom_call.1} parent=1 // pred_region
      %45 = dma.done [#allocation6], 256
    $region25: #{tpu_custom_call.1} parent=1 // pred_fallthru
      _
    %v46 = vld [vmem:[#allocation2] sm:$0xff]
    %v47 = vld [vmem:[#allocation2 + $0x8] sm:$0xff]
    %v48 = vld [vmem:[#allocation5] sm:$0xff]
    %v49 = vld [vmem:[#allocation5 + $0x8] sm:$0xff]
    %v50 = vadd.f32 %v46, %v48
    %v51 = vadd.f32 %v47, %v49
    %vm52 = vcmask 261120
    %v53 = vsel %vm52, %v50, 0.0
    %54 = vadd.xlane.f32.xlu0 %v53
    %v55 = vpop.xlane.xlu0 %54
    %v56 = vsel %vm52, %v51, 0.0
    %57 = vadd.xlane.f32.xlu0 %v56
    %v58 = vpop.xlane.xlu0 %57
    %v59 = vmul.f32 %v50, %v50
    %v60 = vmul.f32 %v51, %v51
    %v61 = vsel %vm52, %v59, 0.0
    %62 = vadd.xlane.f32.xlu0 %v61
    %v63 = vpop.xlane.xlu0 %62
    %v64 = vsel %vm52, %v60, 0.0
    %65 = vadd.xlane.f32.xlu0 %v64
    %v66 = vpop.xlane.xlu0 %65
    %v67 = vmul.f32 %v55, 0.03125
    %v68 = vmul.f32 %v58, 0.03125
    %v69 = vmul.f32 %v55, %v67
    %v70 = vmul.f32 %v58, %v68
    %v71 = vsub.f32 %v63, %v69
    %v72 = vsub.f32 %v66, %v70
    %v73 = vmax.f32 %v71, 0.0
    %v74 = vmax.f32 %v72, 0.0
    %v75 = vmul.f32 %v73, 0.032258064
    %v76 = vmul.f32 %v74, 0.032258064
    %v77 = vrsqrt.pop %v75
    %v78 = vmul.f32 %v75, %v77
    %vm79 = vcmp.eq.f32.partialorder %v75, inf
    %v80 = vsel %vm79, %v75, %v78
    %vm81 = vcmp.eq.f32.partialorder %v75, 0.0
    %v82 = vand.u32 %v75, 2147483648
    %v83 = vsel %vm81, %v82, %v80
    %v84 = vrsqrt.pop %v76
    %v85 = vmul.f32 %v76, %v84
    %vm86 = vcmp.eq.f32.partialorder %v76, inf
    %v87 = vsel %vm86, %v76, %v85
    %vm88 = vcmp.eq.f32.partialorder %v76, 0.0
    %v89 = vand.u32 %v76, 2147483648
    %v90 = vsel %vm88, %v89, %v87
    %v91 = vadd.f32 %v83, 1e-06
    %v92 = vadd.f32 %v90, 1e-06
    %v93 = vrcp.pop %v91
    %v94 = vrcp.pop %v92
    %v95 = vld [vmem:[%s2] sm:$0x1]
    %v96 = vld [vmem:[%s3] sm:$0x1]
    %v97 = vsub.f32 %v50, %v67
    %v98 = vsub.f32 %v51, %v68
    %v100 = vlaneseq
    %v101 = vshrl.u32 %v100, 7
    %v102 = vsub.s32 0, %v101
    %v103 = vrot.slane %v95, %v102
    %v105 = vmul.f32 %v93, %v103
    %v106 = vmul.f32 %v94, %v103
    %v107 = vmul.f32 %v97, %v105
    %v108 = vmul.f32 %v98, %v106
    %v110 = vlaneseq
    %v111 = vshrl.u32 %v110, 7
    %v112 = vsub.s32 0, %v111
    %v113 = vrot.slane %v96, %v112
    %v115 = vadd.f32 %v107, %v113
    %v116 = vadd.f32 %v108, %v113
    %117 = vst.msk [vmem:[#allocation7] sm:$0xff] %vm52, %v115
    %118 = vst.msk [vmem:[#allocation7 + $0x8] sm:$0xff] %vm52, %v116
    // Predicated region
    $region26: #{tpu_custom_call.1} parent=1 // pred_check
      _
    $region27: #{tpu_custom_call.1} parent=1 // pred_check_branch
      %120 = sbr.rel (0) target = $region29
    $region28: #{tpu_custom_call.1} parent=1 // pred_region
      %s122 = ssub.s32 256, 256
      %123 = vsyncadd [#allocation4], %s122
      %s124 = sshll.u32 [#allocation7], 4
      %s125 = int_to_ptr.vmem [resolvable:$true] %s124
      %130 = dma.vmem_to_hbm [thread:$0]  %s125, 256, %s4, [#allocation4], 128, 128, 8
    $region29: #{tpu_custom_call.1} parent=1 // pred_fallthru
      _
    // Predicated region
    $region30: #{tpu_custom_call.1} parent=1 // pred_check
      _
    $region31: #{tpu_custom_call.1} parent=1 // pred_check_branch
      %132 = sbr.rel (0) target = $region33
    $region32: #{tpu_custom_call.1} parent=1 // pred_region
      %133 = dma.done [#allocation4], 256
    $region33: #{tpu_custom_call.1} parent=1 // pred_fallthru
      _
    %134 = vsyncpa [#allocation3], 1
    %135 = vsyncpa [#allocation6], 1
    %136 = vsyncpa [#allocation4], 1

</llo_original>
